<compile_context>
chip_gen: v7x
topology: tpu7x:2x2x1
jax: 0.10.0
libtpu: 0.0.40
codegen_flags: <defaults>
</compile_context>

<pallas_src>
import functools

import jax
import jax.numpy as jnp
from jax.experimental import pallas as pl
from jax.experimental.pallas import tpu as pltpu

# ---- logical model sizes (PyTorch IrisNet) ----------------------------------
IN_F, HID_F, OUT_F = 4, 50, 3

# ---- padded, hardware-friendly sizes ----------------------------------------
IN_PAD = 8       # sublane multiple for x's last dim / w1's first dim
HID_PAD = 128    # lane-aligned hidden width
OUT_PAD = 128    # lane-dense output width

# Row layout of the packed parameter slab (all offsets are multiples of 8 so
# static slices never straddle an (8,128) tile boundary).
W1_ROW = 0                 # rows 0..7    : fc1 weight  (IN_PAD, HID_PAD)
B1_ROW = IN_PAD            # row  8       : fc1 bias    (1, HID_PAD)
W2_ROW = 16                # rows 16..143 : fc2 weight  (HID_PAD, OUT_PAD)
B2_ROW = W2_ROW + HID_PAD  # row  144     : fc2 bias    (1, OUT_PAD)
P_ROWS = 152               # total rows (multiple of 8)


def irisnet_kernel(x_ref, p_ref, o_ref):
    # Static, tile-aligned views into the packed parameter slab.
    w1 = p_ref[W1_ROW:W1_ROW + IN_PAD, :]        # (8, 128)
    b1 = p_ref[B1_ROW:B1_ROW + 1, :]             # (1, 128)
    w2 = p_ref[W2_ROW:W2_ROW + HID_PAD, :]       # (128, 128)
    b2 = p_ref[B2_ROW:B2_ROW + 1, :]             # (1, 128)

    # fc1 + ReLU  (padded columns stay exactly zero: zero weights, zero bias)
    h = jnp.dot(x_ref[...], w1, preferred_element_type=jnp.float32) + b1
    h = jnp.maximum(h, 0.0)
    # fc2 (padded hidden rows of w2 are zero; padded output lanes are zero)
    y = jnp.dot(h, w2, preferred_element_type=jnp.float32) + b2
    o_ref[...] = y.astype(o_ref.dtype)


def pack_params(w1, b1, w2, b2):
    """Pack PyTorch-layout params into one zero-padded (152, 128) f32 slab.

    w1: (4, 50)  (already transposed to (in, out)),  b1: (50,)
    w2: (50, 3)  (transposed to (in, out)),          b2: (3,)
    """
    p = jnp.zeros((P_ROWS, HID_PAD), jnp.float32)
    p = p.at[W1_ROW:W1_ROW + IN_F, :HID_F].set(w1.astype(jnp.float32))
    p = p.at[B1_ROW, :HID_F].set(b1.astype(jnp.float32))
    p = p.at[W2_ROW:W2_ROW + HID_F, :OUT_F].set(w2.astype(jnp.float32))
    p = p.at[B2_ROW, :OUT_F].set(b2.astype(jnp.float32))
    return p


def _round_up(n, m):
    return ((n + m - 1) // m) * m


def irisnet_forward(x, params_packed, *, tile_b=512):
    """y = relu(x @ w1 + b1) @ w2 + b2  for x of shape (B, 4)."""
    B = x.shape[0]

    # Batch tile: multiple of 8, capped so small batches are a single step.
    tb = min(tile_b, _round_up(B, 8))
    tb = max(8, _round_up(tb, 8))
    b_pad = _round_up(B, tb)
    grid = (b_pad // tb,)

    # Pad x to (b_pad, IN_PAD) with zeros (padded rows/features are harmless
    # and are sliced off / multiplied by zero weights).
    x_pad = jnp.zeros((b_pad, IN_PAD), jnp.float32)
    x_pad = x_pad.at[:B, :IN_F].set(x.astype(jnp.float32))

    cost = pl.CostEstimate(
        flops=2 * b_pad * (IN_F * HID_F + HID_F * OUT_F),
        transcendentals=0,
        bytes_accessed=(b_pad * IN_PAD + P_ROWS * HID_PAD + b_pad * OUT_PAD) * 4,
    )

    out_pad = pl.pallas_call(
        irisnet_kernel,
        out_shape=jax.ShapeDtypeStruct((b_pad, OUT_PAD), jnp.float32),
        grid_spec=pltpu.PrefetchScalarGridSpec(
            num_scalar_prefetch=0,
            grid=grid,
            in_specs=[
                # x: one batch-row tile per grid step.
                pl.BlockSpec((tb, IN_PAD), lambda i: (i, 0)),
                # packed params: full slab, VMEM-resident across all steps.
                pl.BlockSpec((P_ROWS, HID_PAD), lambda i: (0, 0)),
            ],
            out_specs=pl.BlockSpec((tb, OUT_PAD), lambda i: (i, 0)),
        ),
        compiler_params=pltpu.CompilerParams(
            dimension_semantics=("parallel",),
        ),
        cost_estimate=cost,
    )(x_pad, params_packed)

    # Slice lane-dense padded output back to the logical (B, 3).
    return out_pad[:B, :OUT_F]


def init_params(key):
    """Deterministic init mirroring PyTorch nn.Linear defaults:
    U(-1/sqrt(fan_in), 1/sqrt(fan_in)) for both weight and bias.
    Weights stored as (in, out) = transpose of PyTorch's (out, in) layout."""
    k1, k2, k3, k4 = jax.random.split(key, 4)
    bound1 = 1.0 / jnp.sqrt(float(IN_F))
    bound2 = 1.0 / jnp.sqrt(float(HID_F))
    w1 = jax.random.uniform(k1, (IN_F, HID_F), jnp.float32, -bound1, bound1)
    b1 = jax.random.uniform(k2, (HID_F,), jnp.float32, -bound1, bound1)
    w2 = jax.random.uniform(k3, (HID_F, OUT_F), jnp.float32, -bound2, bound2)
    b2 = jax.random.uniform(k4, (OUT_F,), jnp.float32, -bound2, bound2)
    return w1, b1, w2, b2


if __name__ == "__main__":
    key = jax.random.PRNGKey(0)
    k_x, k_p = jax.random.split(key)

    # Small Iris-like batch: 8 samples x 4 features.
    x = jax.random.normal(k_x, (8, IN_F), jnp.float32)
    w1, b1, w2, b2 = init_params(k_p)
    params_packed = pack_params(w1, b1, w2, b2)

    out = irisnet_forward(x, params_packed)
    jax.block_until_ready(out)

    # Pure-JAX reference check (exact f32 math, kernel stays f32 for parity).
    ref = jnp.maximum(x @ w1 + b1[None, :], 0.0) @ w2 + b2[None, :]
    assert out.shape == (8, OUT_F)
    assert jnp.allclose(out, ref, atol=1e-5, rtol=1e-5)

    # Also sanity-check a larger, non-multiple-of-tile batch (exercises the
    # batch grid + padding path).
    xb = jax.random.normal(jax.random.PRNGKey(1), (1000, IN_F), jnp.float32)
    outb = irisnet_forward(xb, params_packed)
    jax.block_until_ready(outb)
    refb = jnp.maximum(xb @ w1 + b1[None, :], 0.0) @ w2 + b2[None, :]
    assert outb.shape == (1000, OUT_F)
    assert jnp.allclose(outb, refb, atol=1e-4, rtol=1e-4)

    print("KERNEL_OK")
</pallas_src>

<mosaic_0001>
module attributes {stable_mosaic.version = 11 : i64} {
  func.func @irisnet_kernel(%arg0: i32, %arg1: memref<8x8xf32, #tpu.memory_space<vmem>>, %arg2: memref<152x128xf32, #tpu.memory_space<vmem>>, %arg3: memref<8x128xf32, #tpu.memory_space<vmem>>) attributes {dimension_semantics = [#tpu.dimension_semantics<parallel>], iteration_bounds = array<i64: 1>, scalar_prefetch = 0 : i64, scratch_operands = 0 : i64, tpu.core_type = #tpu.core_type<tc>, window_params = [{transform_indices = @transform_0, window_bounds = array<i64: 8, 8>}, {pipeline_mode = #tpu.pipeline_mode<synchronous>, transform_indices = @transform_1, window_bounds = array<i64: 152, 128>}, {transform_indices = @transform_2, window_bounds = array<i64: 8, 128>}]} {
    %c0 = arith.constant 0 : index
    %c0_0 = arith.constant 0 : index
    %0 = vector.load %arg2[%c0, %c0_0] : memref<152x128xf32, #tpu.memory_space<vmem>>, vector<8x128xf32>
    %c8 = arith.constant 8 : index
    %c0_1 = arith.constant 0 : index
    %1 = vector.load %arg2[%c8, %c0_1] : memref<152x128xf32, #tpu.memory_space<vmem>>, vector<1x128xf32>
    %c16 = arith.constant 16 : index
    %c0_2 = arith.constant 0 : index
    %2 = vector.load %arg2[%c16, %c0_2] : memref<152x128xf32, #tpu.memory_space<vmem>>, vector<128x128xf32>
    %c144 = arith.constant 144 : index
    %c0_3 = arith.constant 0 : index
    %3 = vector.load %arg2[%c144, %c0_3] : memref<152x128xf32, #tpu.memory_space<vmem>>, vector<1x128xf32>
    %c0_4 = arith.constant 0 : index
    %c0_5 = arith.constant 0 : index
    %4 = vector.load %arg1[%c0_4, %c0_5] : memref<8x8xf32, #tpu.memory_space<vmem>>, vector<8x8xf32>
    %cst = arith.constant dense<0.000000e+00> : vector<8x128xf32>
    %5 = tpu.matmul %4, %0, %cst {dimension_numbers = #tpu.dot_dimension_numbers<[1], [0], [0], [1], [0, 0, 1, 1], [], []>} : vector<8x8xf32>, vector<8x128xf32>, vector<8x128xf32> -> vector<8x128xf32>
    %6 = vector.broadcast %1 : vector<1x128xf32> to vector<8x128xf32>
    %7 = arith.addf %5, %6 : vector<8x128xf32>
    %cst_6 = arith.constant 0.000000e+00 : f32
    %8 = vector.broadcast %cst_6 : f32 to vector<8x128xf32>
    %9 = arith.maximumf %7, %8 : vector<8x128xf32>
    %cst_7 = arith.constant dense<0.000000e+00> : vector<8x128xf32>
    %10 = tpu.matmul %9, %2, %cst_7 {dimension_numbers = #tpu.dot_dimension_numbers<[1], [0], [0], [1], [0, 0, 1, 1], [], []>} : vector<8x128xf32>, vector<128x128xf32>, vector<8x128xf32> -> vector<8x128xf32>
    %11 = vector.broadcast %3 : vector<1x128xf32> to vector<8x128xf32>
    %12 = arith.addf %10, %11 : vector<8x128xf32>
    %c0_8 = arith.constant 0 : index
    %c0_9 = arith.constant 0 : index
    %13 = vector.load %arg3[%c0_8, %c0_9] : memref<8x128xf32, #tpu.memory_space<vmem>>, vector<8x128xf32>
    tpu.vector_store %arg3[%c0_8, %c0_9], %12 {strides = array<i32>} : memref<8x128xf32, #tpu.memory_space<vmem>>, vector<8x128xf32>,
    return
  }
  func.func @transform_0(%arg0: i32) -> (i32, i32) {
    %c0_i32 = arith.constant 0 : i32
    %c0_i32_0 = arith.constant 0 : i32
    return %arg0, %c0_i32 : i32, i32
  }
  func.func @transform_1(%arg0: i32) -> (i32, i32) {
    %c0_i32 = arith.constant 0 : i32
    %c0_i32_0 = arith.constant 0 : i32
    %c0_i32_1 = arith.constant 0 : i32
    return %c0_i32, %c0_i32_0 : i32, i32
  }
  func.func @transform_2(%arg0: i32) -> (i32, i32) {
    %c0_i32 = arith.constant 0 : i32
    %c0_i32_0 = arith.constant 0 : i32
    return %arg0, %c0_i32 : i32, i32
  }
}

</mosaic_0001>

<llo_original>
// kernel: tpu_custom_call.1
$region0: #{tpu_custom_call.1}
  #allocation0 [shape = 'u32[]', space=smem, size = 0x4, offset = 0x4, fixed_abs, tag = 'smem constant byte address 0x4 - core index']
  #allocation1 [shape = 'u32[144,128]{1,0:T(1,128)}', space=vmem, size = 0x12000, scoped, tag = 'internal scratch']
  %s0 = inlined_call_operand.hbm [shape: f32[8,8], index: 0, kind: input, shape index: {}]
  %s1 = inlined_call_operand.hbm [shape: f32[152,128], index: 1, kind: input, shape index: {}]
  %s2 = inlined_call_operand.hbm [shape: f32[8,128], index: 2, kind: output, shape index: {}]
  %s3 = sld [smem:[#allocation0]]
  $region26: #{tpu_custom_call.1} parent=0
    _
  %s5 = ssub.s32 1, %s3
  %s6 = scalar_select 0, %s5, %s3
  $region1: #{tpu_custom_call.1} parent=0
    #allocation2 [shape = 'u8[4096]{0}', space=vmem, size = 0x1000, scoped, tag = 'input window, operand 0, single buffered']
    #allocation3 [shape = 's32[1]{0}', space=sflag, size = 0x4, scoped, tag = 'scoped memory for tpu_custom_call.1']
    #allocation4 [shape = 's32[1]{0}', space=sflag, size = 0x4, scoped, tag = 'scoped memory for tpu_custom_call.1']
    #allocation5 [shape = 'u8[77824]{0}', space=vmem, size = 0x13000, scoped, tag = 'input window, operand 1, single buffered']
    #allocation6 [shape = 's32[1]{0}', space=sflag, size = 0x4, scoped, tag = 'scoped memory for tpu_custom_call.1']
    #allocation7 [shape = 'u8[4096]{0}', space=vmem, size = 0x1000, scoped, tag = 'output window, operand 0, single buffered']
    %7 = vsyncpa [#allocation3], 0
    %8 = vsyncpa [#allocation6], 0
    %9 = vsyncpa [#allocation4], 0
    // Predicated region
    $region2: #{tpu_custom_call.1} parent=1 // pred_check
      _
    $region3: #{tpu_custom_call.1} parent=1 // pred_check_branch
      %11 = sbr.rel (0) target = $region5
    $region4: #{tpu_custom_call.1} parent=1 // pred_region
      %s13 = ssub.s32 128, 128
      %14 = vsyncadd [#allocation3], %s13
      %s16 = sshll.u32 [#allocation2], 4
      %s17 = int_to_ptr.vmem [resolvable:$true] %s16
      %19 = dma.hbm_to_vmem [thread:$0]  %s0, 128, %s17, [#allocation3]
    $region5: #{tpu_custom_call.1} parent=1 // pred_fallthru
      _
    // Predicated region
    $region6: #{tpu_custom_call.1} parent=1 // pred_check
      _
    $region7: #{tpu_custom_call.1} parent=1 // pred_check_branch
      %21 = sbr.rel (0) target = $region9
    $region8: #{tpu_custom_call.1} parent=1 // pred_region
      %s23 = ssub.s32 2432, 2432
      %24 = vsyncadd [#allocation6], %s23
      %s25 = sshll.u32 [#allocation5], 4
      %s26 = int_to_ptr.vmem [resolvable:$true] %s25
      %31 = dma.hbm_to_vmem [thread:$0]  %s1, 2432, %s26, [#allocation6], 128, 128, 8
    $region9: #{tpu_custom_call.1} parent=1 // pred_fallthru
      _
    // Predicated region
    $region10: #{tpu_custom_call.1} parent=1 // pred_check
      _
    $region11: #{tpu_custom_call.1} parent=1 // pred_check_branch
      %33 = sbr.rel (0) target = $region13
    $region12: #{tpu_custom_call.1} parent=1 // pred_region
      %34 = dma.done [#allocation3], 128
    $region13: #{tpu_custom_call.1} parent=1 // pred_fallthru
      _
    // Predicated region
    $region14: #{tpu_custom_call.1} parent=1 // pred_check
      _
    $region15: #{tpu_custom_call.1} parent=1 // pred_check_branch
      %36 = sbr.rel (0) target = $region17
    $region16: #{tpu_custom_call.1} parent=1 // pred_region
      %37 = dma.done [#allocation6], 2432
    $region17: #{tpu_custom_call.1} parent=1 // pred_fallthru
      _
    %v38 = vld [vmem:[#allocation5] sm:$0xff]
    %v39 = vld [vmem:[#allocation5 + $0x8] sm:$0x1]
    %v40 = vld [vmem:[#allocation5 + $0x10] sm:$0xff]
    %v41 = vld [vmem:[#allocation5 + $0x18] sm:$0xff]
    %v42 = vld [vmem:[#allocation5 + $0x20] sm:$0xff]
    %v43 = vld [vmem:[#allocation5 + $0x28] sm:$0xff]
    %v44 = vld [vmem:[#allocation5 + $0x30] sm:$0xff]
    %v45 = vld [vmem:[#allocation5 + $0x38] sm:$0xff]
    %v46 = vld [vmem:[#allocation5 + $0x40] sm:$0xff]
    %v47 = vld [vmem:[#allocation5 + $0x48] sm:$0xff]
    %v48 = vld [vmem:[#allocation5 + $0x50] sm:$0xff]
    %v49 = vld [vmem:[#allocation5 + $0x58] sm:$0xff]
    %v50 = vld [vmem:[#allocation5 + $0x60] sm:$0xff]
    %v51 = vld [vmem:[#allocation5 + $0x68] sm:$0xff]
    %v52 = vld [vmem:[#allocation5 + $0x70] sm:$0xff]
    %v53 = vld [vmem:[#allocation5 + $0x78] sm:$0xff]
    %v54 = vld [vmem:[#allocation5 + $0x80] sm:$0xff]
    %v55 = vld [vmem:[#allocation5 + $0x88] sm:$0xff]
    %v56 = vld [vmem:[#allocation5 + $0x90] sm:$0x1]
    %v57 = vld [vmem:[#allocation2] sm:$0xff]
    %v58 = vlaneseq
    %v59 = vshrl.u32 %v58, 7
    %v60 = vsub.s32 0, %v59
    %v61 = vrot.slane %v39, %v60
    %vm62 = vcmask 64512
    %v64 = vsel %vm62, %v57, 0
    %66 = vmatprep.subr.mxu0 0.0
    %67 = vmatpush1.msra.mxu0 %v38
    %68 = vmatprep.subr.mxu0 0.0
    %69 = vmatpush1.msra.mxu0 0.0
    %70 = vmatprep.subr.mxu0 0.0
    %71 = vmatpush1.msra.mxu0 0.0
    %72 = vmatprep.subr.mxu0 0.0
    %73 = vmatpush1.msra.mxu0 0.0
    %74 = vmatprep.subr.mxu0 0.0
    %75 = vmatpush1.msra.mxu0 0.0
    %76 = vmatprep.subr.mxu0 0.0
    %77 = vmatpush1.msra.mxu0 0.0
    %78 = vmatprep.subr.mxu0 0.0
    %79 = vmatpush1.msra.mxu0 0.0
    %80 = vmatprep.subr.mxu0 0.0
    %81 = vmatpush1.msra.mxu0 0.0
    %82 = vmatprep.subr.mxu0 0.0
    %83 = vmatpush1.msra.mxu0 0.0
    %84 = vmatprep.subr.mxu0 0.0
    %85 = vmatpush1.msra.mxu0 0.0
    %86 = vmatprep.subr.mxu0 0.0
    %87 = vmatpush1.msra.mxu0 0.0
    %88 = vmatprep.subr.mxu0 0.0
    %89 = vmatpush1.msra.mxu0 0.0
    %90 = vmatprep.subr.mxu0 0.0
    %91 = vmatpush1.msra.mxu0 0.0
    %92 = vmatprep.subr.mxu0 0.0
    %93 = vmatpush1.msra.mxu0 0.0
    %94 = vmatprep.subr.mxu0 0.0
    %95 = vmatpush1.msra.mxu0 0.0
    %96 = vmatprep.subr.mxu0 0.0
    %97 = vmatpush1.msra.mxu0 0.0
    %98 = vmatprep.subr.mxu0 0.0
    %99 = vmatpush1.msra.mxu0 0.0
    %100 = vmatprep.subr.mxu0 0.0
    %101 = vmatpush1.msra.mxu0 0.0
    %102 = vmatprep.subr.mxu0 0.0
    %103 = vmatpush1.msra.mxu0 0.0
    %104 = vmatprep.subr.mxu0 0.0
    %105 = vmatpush1.msra.mxu0 0.0
    %106 = vmatprep.subr.mxu0 0.0
    %107 = vmatpush1.msra.mxu0 0.0
    %108 = vmatprep.subr.mxu0 0.0
    %109 = vmatpush1.msra.mxu0 0.0
    %110 = vmatprep.subr.mxu0 0.0
    %111 = vmatpush1.msra.mxu0 0.0
    %112 = vmatprep.subr.mxu0 0.0
    %113 = vmatpush1.msra.mxu0 0.0
    %114 = vmatprep.subr.mxu0 0.0
    %115 = vmatpush1.msra.mxu0 0.0
    %116 = vmatprep.subr.mxu0 0.0
    %117 = vmatpush1.msra.mxu0 0.0
    %118 = vmatprep.subr.mxu0 0.0
    %119 = vmatpush1.msra.mxu0 0.0
    %120 = vmatprep.subr.mxu0 0.0
    %121 = vmatpush1.msra.mxu0 0.0
    %122 = vmatprep.subr.mxu0 0.0
    %123 = vmatpush1.msra.mxu0 0.0
    %124 = vmatprep.subr.mxu0 0.0
    %125 = vmatpush1.msra.mxu0 0.0
    %126 = vmatprep.subr.mxu0 0.0
    %127 = vmatpush1.msra.mxu0 0.0
    %128 = vmatprep.subr.mxu0 0.0
    %129 = vmatpush1.msra.mxu0 0.0
    %130 = vmatprep.mubr.f32.mxu0 0.0
    %131 = vmatmul.mubr.f32.gmra.mrb[0].mxu0 %v64
    %v132 = vpop.f32.mrb[0].mxu0
    %v133 = vadd.f32 %v61, %v132
    %v134 = vpop.f32.mrb[0].mxu0
    %135 = vdwg.mxu0
    %v136 = vmax.f32 %v133, 0.0
    %v137 = vlaneseq
    %v138 = vshrl.u32 %v137, 7
    %v139 = vsub.s32 0, %v138
    %v140 = vrot.slane %v56, %v139
    %141 = vmatprep.subr.mxu0 0.0
    %142 = vmatpush1.msra.mxu0 %v40
    %143 = vmatprep.subr.mxu0 0.0
    %144 = vmatpush1.msra.mxu0 %v41
    %145 = vmatprep.subr.mxu0 0.0
    %146 = vmatpush1.msra.mxu0 %v42
    %147 = vmatprep.subr.mxu0 0.0
    %148 = vmatpush1.msra.mxu0 %v43
    %149 = vmatprep.subr.mxu0 0.0
    %150 = vmatpush1.msra.mxu0 %v44
    %151 = vmatprep.subr.mxu0 0.0
    %152 = vmatpush1.msra.mxu0 %v45
    %153 = vmatprep.subr.mxu0 0.0
    %154 = vmatpush1.msra.mxu0 %v46
    %155 = vmatprep.subr.mxu0 0.0
    %156 = vmatpush1.msra.mxu0 %v47
    %157 = vmatprep.subr.mxu0 0.0
    %158 = vmatpush1.msra.mxu0 %v48
    %159 = vmatprep.subr.mxu0 0.0
    %160 = vmatpush1.msra.mxu0 %v49
    %161 = vmatprep.subr.mxu0 0.0
    %162 = vmatpush1.msra.mxu0 %v50
    %163 = vmatprep.subr.mxu0 0.0
    %164 = vmatpush1.msra.mxu0 %v51
    %165 = vmatprep.subr.mxu0 0.0
    %166 = vmatpush1.msra.mxu0 %v52
    %167 = vmatprep.subr.mxu0 0.0
    %168 = vmatpush1.msra.mxu0 %v53
    %169 = vmatprep.subr.mxu0 0.0
    %170 = vmatpush1.msra.mxu0 %v54
    %171 = vmatprep.subr.mxu0 0.0
    %172 = vmatpush1.msra.mxu0 %v55
    %173 = vmatprep.subr.mxu0 0.0
    %174 = vmatpush1.msra.mxu0 0.0
    %175 = vmatprep.subr.mxu0 0.0
    %176 = vmatpush1.msra.mxu0 0.0
    %177 = vmatprep.subr.mxu0 0.0
    %178 = vmatpush1.msra.mxu0 0.0
    %179 = vmatprep.subr.mxu0 0.0
    %180 = vmatpush1.msra.mxu0 0.0
    %181 = vmatprep.subr.mxu0 0.0
    %182 = vmatpush1.msra.mxu0 0.0
    %183 = vmatprep.subr.mxu0 0.0
    %184 = vmatpush1.msra.mxu0 0.0
    %185 = vmatprep.subr.mxu0 0.0
    %186 = vmatpush1.msra.mxu0 0.0
    %187 = vmatprep.subr.mxu0 0.0
    %188 = vmatpush1.msra.mxu0 0.0
    %189 = vmatprep.subr.mxu0 0.0
    %190 = vmatpush1.msra.mxu0 0.0
    %191 = vmatprep.subr.mxu0 0.0
    %192 = vmatpush1.msra.mxu0 0.0
    %193 = vmatprep.subr.mxu0 0.0
    %194 = vmatpush1.msra.mxu0 0.0
    %195 = vmatprep.subr.mxu0 0.0
    %196 = vmatpush1.msra.mxu0 0.0
    %197 = vmatprep.subr.mxu0 0.0
    %198 = vmatpush1.msra.mxu0 0.0
    %199 = vmatprep.subr.mxu0 0.0
    %200 = vmatpush1.msra.mxu0 0.0
    %201 = vmatprep.subr.mxu0 0.0
    %202 = vmatpush1.msra.mxu0 0.0
    %203 = vmatprep.subr.mxu0 0.0
    %204 = vmatpush1.msra.mxu0 0.0
    %205 = vmatprep.mubr.f32.mxu0 0.0
    %206 = vmatmul.mubr.f32.gmra.mrb[0].mxu0 %v136
    %v207 = vpop.f32.mrb[0].mxu0
    %v208 = vadd.f32 %v140, %v207
    %v209 = vpop.f32.mrb[0].mxu0
    %210 = vdwg.mxu0
    %211 = vst [vmem:[#allocation7] sm:$0xff] %v208
    // Predicated region
    $region18: #{tpu_custom_call.1} parent=1 // pred_check
      _
    $region19: #{tpu_custom_call.1} parent=1 // pred_check_branch
      %213 = sbr.rel (0) target = $region21
    $region20: #{tpu_custom_call.1} parent=1 // pred_region
      %s215 = ssub.s32 128, 128
      %216 = vsyncadd [#allocation4], %s215
      %s218 = sshll.u32 [#allocation7], 4
      %s219 = int_to_ptr.vmem [resolvable:$true] %s218
      %221 = dma.vmem_to_hbm [thread:$0]  %s219, 128, %s2, [#allocation4]
    $region21: #{tpu_custom_call.1} parent=1 // pred_fallthru
      _
    // Predicated region
    $region22: #{tpu_custom_call.1} parent=1 // pred_check
      _
    $region23: #{tpu_custom_call.1} parent=1 // pred_check_branch
      %223 = sbr.rel (0) target = $region25
    $region24: #{tpu_custom_call.1} parent=1 // pred_region
      %224 = dma.done [#allocation4], 128
    $region25: #{tpu_custom_call.1} parent=1 // pred_fallthru
      _
    %225 = vsyncpa [#allocation3], 1
    %226 = vsyncpa [#allocation6], 1
    %227 = vsyncpa [#allocation4], 1

</llo_original>
